<compile_context>
chip_gen: v6e
topology: v6e:2x2x1
jax: 0.10.0
libtpu: 0.0.40
codegen_flags: <defaults>
</compile_context>

<pallas_src>
import enum
import functools

import numpy as np
import jax
import jax.numpy as jnp
from jax.experimental import pallas as pl
from jax.experimental.pallas import tpu as pltpu


class StdType(enum.Enum):
    FIXED = 0
    CONSTANT = 1
    VARIABLE = 2


def _round_up(n, m):
    return ((n + m - 1) // m) * m


def _vmem_capacity_bytes():
    """Generation-aware physical VMEM size (falls back to v7x's 64 MiB)."""
    try:
        return int(pltpu.get_tpu_info().vmem_capacity_bytes)
    except Exception:
        return 64 * 1024 * 1024


class DistributionGaussianDiag:
    """JAX analogue of the PyTorch DistributionGaussianDiag (holds arrays)."""

    def __init__(self, mean, logstd, std=None):
        self._mean = mean
        self._logstd = logstd
        self._std = jnp.exp(logstd) if std is None else std
        self._dim = mean.shape[-1]

    @property
    def mean(self):
        return self._mean

    @property
    def mode(self):
        return self._mean

    @property
    def logstd(self):
        return self._logstd

    @property
    def stddev(self):
        return self._std

    def sample(self, key):
        noise = jax.random.normal(key, self._mean.shape, self._mean.dtype)
        return self._mean + self._std * noise

    def log_prob(self, x):
        diff = x - self._mean
        logp = -0.5 * jnp.sum(jnp.square(diff / self._std), axis=-1)
        logp += (-0.5 * self._dim * np.log(2.0 * np.pi)
                 - jnp.sum(jnp.broadcast_to(self._logstd, self._mean.shape), axis=-1))
        return logp

    def entropy(self):
        ent = jnp.sum(jnp.broadcast_to(self._logstd, self._mean.shape), axis=-1)
        ent += 0.5 * self._dim * np.log(2.0 * np.pi * np.e)
        return ent


# ---------------------------------------------------------------------------
# Pallas kernels
# ---------------------------------------------------------------------------
def _variable_kernel(x_ref, w_ref, b_ref, mean_ref, logstd_ref, std_ref, *, out_p):
    """Single fused MXU pass for [mean | logstd]; three lane-dense outputs.

    W layout: [:, 0:out_p] = mean head, [:, out_p:2*out_p] = logstd head.
    x is cast to the matmul compute dtype in-vreg (saves a wrapper HBM pass).
    """
    xb = x_ref[...].astype(w_ref.dtype)
    acc = jnp.dot(xb, w_ref[...], preferred_element_type=jnp.float32) + b_ref[...]
    mean_ref[...] = acc[:, :out_p].astype(mean_ref.dtype)
    ls = acc[:, out_p:]
    logstd_ref[...] = ls.astype(logstd_ref.dtype)
    std_ref[...] = jnp.exp(ls).astype(std_ref.dtype)   # EUP slot, nearly free


def _mean_kernel(x_ref, w_ref, b_ref, mean_ref):
    """CONSTANT / FIXED path: only the mean head goes through the MXU."""
    xb = x_ref[...].astype(w_ref.dtype)
    mean_ref[...] = (jnp.dot(xb, w_ref[...], preferred_element_type=jnp.float32)
                     + b_ref[...]).astype(mean_ref.dtype)


def _variable_kernel_ktiled(x_ref, w_ref, b_ref, mean_ref, logstd_ref, std_ref,
                            acc_ref, *, out_p):
    """K-tiled fallback (weight too large for full VMEM residency)."""
    k = pl.program_id(1)

    @pl.when(k == 0)
    def _():
        acc_ref[...] = jnp.zeros_like(acc_ref)

    xb = x_ref[...].astype(w_ref.dtype)
    acc_ref[...] += jnp.dot(xb, w_ref[...], preferred_element_type=jnp.float32)

    @pl.when(k == pl.num_programs(1) - 1)
    def _():
        acc = acc_ref[...] + b_ref[...]
        mean_ref[...] = acc[:, :out_p].astype(mean_ref.dtype)
        ls = acc[:, out_p:]
        logstd_ref[...] = ls.astype(logstd_ref.dtype)
        std_ref[...] = jnp.exp(ls).astype(std_ref.dtype)


def _mean_kernel_ktiled(x_ref, w_ref, b_ref, mean_ref, acc_ref):
    k = pl.program_id(1)

    @pl.when(k == 0)
    def _():
        acc_ref[...] = jnp.zeros_like(acc_ref)

    xb = x_ref[...].astype(w_ref.dtype)
    acc_ref[...] += jnp.dot(xb, w_ref[...], preferred_element_type=jnp.float32)

    @pl.when(k == pl.num_programs(1) - 1)
    def _():
        mean_ref[...] = (acc_ref[...] + b_ref[...]).astype(mean_ref.dtype)


# ---------------------------------------------------------------------------
# Module
# ---------------------------------------------------------------------------
class DistributionGaussianDiagBuilder:
    """Pallas-backed analogue of the PyTorch module."""

    def __init__(self, in_size, out_size, std_type, init_std,
                 init_output_scale=0.01, key=None,
                 compute_dtype=jnp.bfloat16, out_dtype=jnp.float32):
        self._std_type = std_type
        self._in_size = int(in_size)
        self._out_size = int(out_size)
        # Output feature dim is padded to 128 lanes so stores stay lane-dense;
        # the K (input) dim is intentionally left unpadded (block = full dim).
        self._out_p = _round_up(self._out_size, 128)
        self._compute_dtype = compute_dtype
        self._out_dtype = out_dtype

        cap = _vmem_capacity_bytes()
        self._vmem_budget = int(cap * 0.80)
        self._vmem_limit = min(int(cap * 0.875), 128 * 1024 * 1024)

        if key is None:
            key = jax.random.PRNGKey(0)
        k_mean, k_logstd = jax.random.split(key)

        logstd0 = float(np.log(init_std))

        mean_w = jax.random.uniform(
            k_mean, (self._in_size, self._out_size), jnp.float32,
            minval=-init_output_scale, maxval=init_output_scale)
        mean_w = jnp.pad(mean_w, ((0, 0), (0, self._out_p - self._out_size)))

        if std_type == StdType.VARIABLE:
            logstd_w = jax.random.uniform(
                k_logstd, (self._in_size, self._out_size), jnp.float32,
                minval=-init_output_scale, maxval=init_output_scale)
            logstd_w = jnp.pad(
                logstd_w, ((0, 0), (0, self._out_p - self._out_size)))
            logstd_b = jnp.pad(
                jnp.full((1, self._out_size), logstd0, jnp.float32),
                ((0, 0), (0, self._out_p - self._out_size)))
            # Fused heads: one weight matrix [W_mean | W_logstd] -> single matmul.
            self._w = jnp.concatenate([mean_w, logstd_w], axis=1).astype(compute_dtype)
            self._b = jnp.concatenate(
                [jnp.zeros((1, self._out_p), jnp.float32), logstd_b], axis=1)
            self._logstd_param = None
        elif std_type in (StdType.FIXED, StdType.CONSTANT):
            # TODO(synk): requires_grad distinction (FIXED vs CONSTANT) is a
            # training-time property; both are plain arrays here.
            self._w = mean_w.astype(compute_dtype)
            self._b = jnp.zeros((1, self._out_p), jnp.float32)
            self._logstd_param = jnp.full((1, self._out_size), logstd0, jnp.float32)
        else:
            raise ValueError(f"Unsupported StdType: {std_type}")

        self._w_kp = None   # lazily K-padded weight for the K-tiled fallback

    # -- planning -------------------------------------------------------------
    def _plan(self, b8):
        """Pick (tb, tk).  tk=None -> whole-K resident-weight path."""
        n_cols = self._w.shape[1]
        n_out = 3 if self._std_type == StdType.VARIABLE else 1
        budget = self._vmem_budget
        w_item = jnp.dtype(self._compute_dtype).itemsize
        o_item = jnp.dtype(self._out_dtype).itemsize
        x_item = 4                                    # x streamed in original (f32) dtype
        in_lanes = _round_up(self._in_size, 128)      # VMEM lane padding of x tile
        in_subl = _round_up(self._in_size, 8)
        # Resident (constant index_map) weight/bias counted ONCE (fetched once).
        w_res = in_subl * n_cols * w_item
        b_res = 8 * n_cols * 4

        tb0 = min(2048, b8)
        if b8 > 8:
            # Guarantee >=2 batch grid steps so both v7x TensorCores get work.
            tb0 = min(tb0, _round_up(pl.cdiv(b8, 2), 8))

        def shrink(tb, need_fn):
            while need_fn(tb) > budget and tb > 8:
                tb = max(8, _round_up(tb // 2, 8))
            return tb

        def need_single(tb):
            x_bytes = tb * in_lanes * x_item
            o_bytes = tb * self._out_p * o_item * n_out
            return w_res + b_res + 2 * (x_bytes + o_bytes)

        tb = shrink(tb0, need_single)
        if need_single(tb) <= budget:
            return tb, None

        # K-tiled fallback: weight too large to keep fully VMEM-resident.
        tk = 512
        while tk > 128 and 2 * tk * n_cols * w_item > budget // 2:
            tk //= 2
        # TODO(synk): add N-tiling for heads so wide that even a (128, n_cols)
        # weight block exceeds VMEM; not needed for typical policy-head sizes.

        def need_ktiled(tb):
            x_bytes = tb * tk * x_item
            o_bytes = tb * self._out_p * o_item * n_out
            acc_bytes = tb * n_cols * 4
            return (2 * tk * n_cols * w_item + b_res + acc_bytes
                    + 2 * (x_bytes + o_bytes))

        tb = shrink(tb0, need_ktiled)
        return tb, tk

    def _kpadded_weight(self, tk):
        kp = _round_up(self._in_size, tk)
        if self._w_kp is None or self._w_kp.shape[0] != kp:
            self._w_kp = jnp.pad(self._w, ((0, kp - self._in_size), (0, 0)))
        return self._w_kp

    @staticmethod
    def _trim(a, rows, cols):
        if a.shape == (rows, cols):
            return a
        return a[:rows, :cols]

    # -- forward --------------------------------------------------------------
    def __call__(self, x):
        B, in_size = x.shape
        assert in_size == self._in_size
        out_p, out_size = self._out_p, self._out_size
        n_cols = self._w.shape[1]

        # Only pad the batch to a multiple of 8 when needed (<=7 rows); the
        # grid handles ragged last blocks, so no tb-sized padded copy of x.
        b8 = _round_up(max(B, 1), 8)
        if b8 != B:
            x = jnp.pad(x, ((0, b8 - B), (0, 0)))

        tb, tk = self._plan(b8)
        grid_b = pl.cdiv(b8, tb)

        cparams_1d = pltpu.CompilerParams(
            dimension_semantics=("parallel",),
            vmem_limit_bytes=self._vmem_limit)
        cparams_2d = pltpu.CompilerParams(
            dimension_semantics=("parallel", "arbitrary"),
            vmem_limit_bytes=self._vmem_limit)

        if self._std_type == StdType.VARIABLE:
            out_shapes = tuple(jax.ShapeDtypeStruct((b8, out_p), self._out_dtype)
                               for _ in range(3))
            if tk is None:
                mean, logstd, std = pl.pallas_call(
                    functools.partial(_variable_kernel, out_p=out_p),
                    out_shape=out_shapes,
                    grid=(grid_b,),
                    in_specs=[
                        pl.BlockSpec((tb, in_size), lambda i: (i, 0)),       # x: tiled
                        pl.BlockSpec((in_size, n_cols), lambda i: (0, 0)),   # W: resident
                        pl.BlockSpec((1, n_cols), lambda i: (0, 0)),         # b: resident
                    ],
                    out_specs=tuple(pl.BlockSpec((tb, out_p), lambda i: (i, 0))
                                    for _ in range(3)),
                    compiler_params=cparams_1d,
                )(x, self._w, self._b)
            else:
                kp = _round_up(in_size, tk)
                w_kp = self._kpadded_weight(tk)
                x_kp = x if kp == in_size else jnp.pad(x, ((0, 0), (0, kp - in_size)))
                mean, logstd, std = pl.pallas_call(
                    functools.partial(_variable_kernel_ktiled, out_p=out_p),
                    out_shape=out_shapes,
                    grid=(grid_b, kp // tk),
                    in_specs=[
                        pl.BlockSpec((tb, tk), lambda i, k: (i, k)),
                        pl.BlockSpec((tk, n_cols), lambda i, k: (k, 0)),
                        pl.BlockSpec((1, n_cols), lambda i, k: (0, 0)),
                    ],
                    out_specs=tuple(pl.BlockSpec((tb, out_p), lambda i, k: (i, 0))
                                    for _ in range(3)),
                    scratch_shapes=[pltpu.VMEM((tb, n_cols), jnp.float32)],
                    compiler_params=cparams_2d,
                )(x_kp, w_kp, self._b)
            mean = self._trim(mean, B, out_size)
            logstd = self._trim(logstd, B, out_size)
            std = self._trim(std, B, out_size)
        else:  # FIXED / CONSTANT
            out_shape = jax.ShapeDtypeStruct((b8, out_p), self._out_dtype)
            if tk is None:
                mean_full = pl.pallas_call(
                    _mean_kernel,
                    out_shape=out_shape,
                    grid=(grid_b,),
                    in_specs=[
                        pl.BlockSpec((tb, in_size), lambda i: (i, 0)),
                        pl.BlockSpec((in_size, out_p), lambda i: (0, 0)),
                        pl.BlockSpec((1, out_p), lambda i: (0, 0)),
                    ],
                    out_specs=pl.BlockSpec((tb, out_p), lambda i: (i, 0)),
                    compiler_params=cparams_1d,
                )(x, self._w, self._b)
            else:
                kp = _round_up(in_size, tk)
                w_kp = self._kpadded_weight(tk)
                x_kp = x if kp == in_size else jnp.pad(x, ((0, 0), (0, kp - in_size)))
                mean_full = pl.pallas_call(
                    _mean_kernel_ktiled,
                    out_shape=out_shape,
                    grid=(grid_b, kp // tk),
                    in_specs=[
                        pl.BlockSpec((tb, tk), lambda i, k: (i, k)),
                        pl.BlockSpec((tk, out_p), lambda i, k: (k, 0)),
                        pl.BlockSpec((1, out_p), lambda i, k: (0, 0)),
                    ],
                    out_specs=pl.BlockSpec((tb, out_p), lambda i, k: (i, 0)),
                    scratch_shapes=[pltpu.VMEM((tb, out_p), jnp.float32)],
                    compiler_params=cparams_2d,
                )(x_kp, w_kp, self._b)
            mean = self._trim(mean_full, B, out_size)
            # logstd/std come from the tiny (out_size,) parameter; std is exp of
            # the parameter broadcast once (no B*out transcendental pass).
            logstd = jnp.broadcast_to(self._logstd_param, mean.shape).astype(mean.dtype)
            std = jnp.broadcast_to(jnp.exp(self._logstd_param), mean.shape).astype(mean.dtype)

        return DistributionGaussianDiag(mean=mean, logstd=logstd, std=std)

    # -- pure-JAX reference (same bf16-rounded operands) for validation -------
    def reference_forward(self, x):
        xf = x.astype(self._compute_dtype).astype(jnp.float32)
        w = self._w.astype(jnp.float32)
        acc = xf @ w + self._b
        mean = acc[:, : self._out_size]
        if self._std_type == StdType.VARIABLE:
            logstd = acc[:, self._out_p: self._out_p + self._out_size]
        else:
            logstd = jnp.broadcast_to(self._logstd_param, mean.shape)
        return mean, logstd, jnp.exp(logstd)


# ---------------------------------------------------------------------------
# Demo / smoke test
# ---------------------------------------------------------------------------
if __name__ == "__main__":
    key = jax.random.PRNGKey(0)
    k_in, k_in2, k_p1, k_p2 = jax.random.split(key, 4)

    B, IN, OUT = 8, 32, 16
    x = jax.random.normal(k_in, (B, IN), jnp.float32)

    # VARIABLE path
    builder_var = DistributionGaussianDiagBuilder(
        IN, OUT, StdType.VARIABLE, init_std=0.5, init_output_scale=0.01, key=k_p1)
    dist_var = builder_var(x)
    jax.block_until_ready((dist_var.mean, dist_var.logstd, dist_var.stddev))
    ref_mean, ref_logstd, ref_std = builder_var.reference_forward(x)
    assert dist_var.mean.shape == (B, OUT)
    assert jnp.allclose(dist_var.mean, ref_mean, atol=2e-4, rtol=2e-4)
    assert jnp.allclose(dist_var.logstd, ref_logstd, atol=2e-4, rtol=2e-4)
    assert jnp.allclose(dist_var.stddev, ref_std, atol=2e-4, rtol=2e-4)

    # Ragged batch (13 -> padded to 16, two batch tiles of 8 -> 2 grid steps)
    B2 = 13
    x2 = jax.random.normal(k_in2, (B2, IN), jnp.float32)
    dist_var2 = builder_var(x2)
    jax.block_until_ready((dist_var2.mean, dist_var2.stddev))
    r2_mean, r2_logstd, r2_std = builder_var.reference_forward(x2)
    assert dist_var2.mean.shape == (B2, OUT)
    assert jnp.allclose(dist_var2.mean, r2_mean, atol=2e-4, rtol=2e-4)
    assert jnp.allclose(dist_var2.logstd, r2_logstd, atol=2e-4, rtol=2e-4)
    assert jnp.allclose(dist_var2.stddev, r2_std, atol=2e-4, rtol=2e-4)

    # CONSTANT path
    builder_const = DistributionGaussianDiagBuilder(
        IN, OUT, StdType.CONSTANT, init_std=0.5, init_output_scale=0.01, key=k_p2)
    dist_const = builder_const(x)
    jax.block_until_ready((dist_const.mean, dist_const.logstd, dist_const.stddev))
    rc_mean, rc_logstd, rc_std = builder_const.reference_forward(x)
    assert jnp.allclose(dist_const.mean, rc_mean, atol=2e-4, rtol=2e-4)
    assert jnp.allclose(dist_const.logstd, rc_logstd, atol=1e-6)
    assert jnp.allclose(dist_const.stddev, rc_std, atol=1e-6)

    # FIXED path (same compute path as CONSTANT)
    builder_fixed = DistributionGaussianDiagBuilder(
        IN, OUT, StdType.FIXED, init_std=0.7, init_output_scale=0.01, key=k_p2)
    dist_fixed = builder_fixed(x)
    jax.block_until_ready(dist_fixed.mean)
    assert jnp.allclose(dist_fixed.logstd,
                        jnp.full((B, OUT), np.log(0.7), np.float32), atol=1e-6)

    print("KERNEL_OK")
</pallas_src>

<mosaic_0001>
module attributes {stable_mosaic.version = 11 : i64} {
  func.func @_variable_kernel(%arg0: i32, %arg1: memref<8x32xf32, #tpu.memory_space<vmem>>, %arg2: memref<32x256xbf16, #tpu.memory_space<vmem>>, %arg3: memref<1x256xf32, #tpu.memory_space<vmem>>, %arg4: memref<8x128xf32, #tpu.memory_space<vmem>>, %arg5: memref<8x128xf32, #tpu.memory_space<vmem>>, %arg6: memref<8x128xf32, #tpu.memory_space<vmem>>) attributes {dimension_semantics = [#tpu.dimension_semantics<parallel>], iteration_bounds = array<i64: 1>, scalar_prefetch = 0 : i64, scratch_operands = 0 : i64, tpu.core_type = #tpu.core_type<tc>, window_params = [{transform_indices = @transform_0, window_bounds = array<i64: 8, 32>}, {pipeline_mode = #tpu.pipeline_mode<synchronous>, transform_indices = @transform_1, window_bounds = array<i64: 32, 256>}, {pipeline_mode = #tpu.pipeline_mode<synchronous>, transform_indices = @transform_2, window_bounds = array<i64: 1, 256>}, {transform_indices = @transform_3, window_bounds = array<i64: 8, 128>}, {transform_indices = @transform_4, window_bounds = array<i64: 8, 128>}, {transform_indices = @transform_5, window_bounds = array<i64: 8, 128>}]} {
    %c0 = arith.constant 0 : index
    %c0_0 = arith.constant 0 : index
    %0 = vector.load %arg1[%c0, %c0_0] : memref<8x32xf32, #tpu.memory_space<vmem>>, vector<8x32xf32>
    %1 = arith.truncf %0 : vector<8x32xf32> to vector<8x32xbf16>
    %c0_1 = arith.constant 0 : index
    %c0_2 = arith.constant 0 : index
    %2 = vector.load %arg2[%c0_1, %c0_2] : memref<32x256xbf16, #tpu.memory_space<vmem>>, vector<32x256xbf16>
    %cst = arith.constant dense<0.000000e+00> : vector<8x256xf32>
    %3 = tpu.matmul %1, %2, %cst {dimension_numbers = #tpu.dot_dimension_numbers<[1], [0], [0], [1], [0, 0, 1, 1], [], []>} : vector<8x32xbf16>, vector<32x256xbf16>, vector<8x256xf32> -> vector<8x256xf32>
    %c0_3 = arith.constant 0 : index
    %c0_4 = arith.constant 0 : index
    %4 = vector.load %arg3[%c0_3, %c0_4] : memref<1x256xf32, #tpu.memory_space<vmem>>, vector<1x256xf32>
    %5 = vector.broadcast %4 : vector<1x256xf32> to vector<8x256xf32>
    %6 = arith.addf %3, %5 : vector<8x256xf32>
    %7 = vector.extract_strided_slice %6 {offsets = [0, 0], sizes = [8, 128], strides = [1, 1]} : vector<8x256xf32> to vector<8x128xf32>
    %c0_5 = arith.constant 0 : index
    %c0_6 = arith.constant 0 : index
    %8 = vector.load %arg4[%c0_5, %c0_6] : memref<8x128xf32, #tpu.memory_space<vmem>>, vector<8x128xf32>
    tpu.vector_store %arg4[%c0_5, %c0_6], %7 {strides = array<i32>} : memref<8x128xf32, #tpu.memory_space<vmem>>, vector<8x128xf32>,
    %9 = vector.extract_strided_slice %6 {offsets = [0, 128], sizes = [8, 128], strides = [1, 1]} : vector<8x256xf32> to vector<8x128xf32>
    %c0_7 = arith.constant 0 : index
    %c0_8 = arith.constant 0 : index
    %10 = vector.load %arg5[%c0_7, %c0_8] : memref<8x128xf32, #tpu.memory_space<vmem>>, vector<8x128xf32>
    tpu.vector_store %arg5[%c0_7, %c0_8], %9 {strides = array<i32>} : memref<8x128xf32, #tpu.memory_space<vmem>>, vector<8x128xf32>,
    %11 = math.exp %9 : vector<8x128xf32>
    %c0_9 = arith.constant 0 : index
    %c0_10 = arith.constant 0 : index
    %12 = vector.load %arg6[%c0_9, %c0_10] : memref<8x128xf32, #tpu.memory_space<vmem>>, vector<8x128xf32>
    tpu.vector_store %arg6[%c0_9, %c0_10], %11 {strides = array<i32>} : memref<8x128xf32, #tpu.memory_space<vmem>>, vector<8x128xf32>,
    return
  }
  func.func @transform_0(%arg0: i32) -> (i32, i32) {
    %c0_i32 = arith.constant 0 : i32
    %c0_i32_0 = arith.constant 0 : i32
    return %arg0, %c0_i32 : i32, i32
  }
  func.func @transform_1(%arg0: i32) -> (i32, i32) {
    %c0_i32 = arith.constant 0 : i32
    %c0_i32_0 = arith.constant 0 : i32
    %c0_i32_1 = arith.constant 0 : i32
    return %c0_i32, %c0_i32_0 : i32, i32
  }
  func.func @transform_2(%arg0: i32) -> (i32, i32) {
    %c0_i32 = arith.constant 0 : i32
    %c0_i32_0 = arith.constant 0 : i32
    %c0_i32_1 = arith.constant 0 : i32
    return %c0_i32, %c0_i32_0 : i32, i32
  }
  func.func @transform_3(%arg0: i32) -> (i32, i32) {
    %c0_i32 = arith.constant 0 : i32
    %c0_i32_0 = arith.constant 0 : i32
    return %arg0, %c0_i32 : i32, i32
  }
  func.func @transform_4(%arg0: i32) -> (i32, i32) {
    %c0_i32 = arith.constant 0 : i32
    %c0_i32_0 = arith.constant 0 : i32
    return %arg0, %c0_i32 : i32, i32
  }
  func.func @transform_5(%arg0: i32) -> (i32, i32) {
    %c0_i32 = arith.constant 0 : i32
    %c0_i32_0 = arith.constant 0 : i32
    return %arg0, %c0_i32 : i32, i32
  }
}

</mosaic_0001>

<llo_original>
// kernel: tpu_custom_call.1
$region0: #{tpu_custom_call.1}
  #allocation0 [shape = 'u32[]', space=smem, size = 0x4, offset = 0x4, fixed_abs, tag = 'smem constant byte address 0x4 - core index']
  #allocation1 [shape = 'u32[144,128]{1,0:T(1,128)}', space=vmem, size = 0x12000, scoped, tag = 'internal scratch']
  %s0 = inlined_call_operand.hbm [shape: f32[8,32], index: 0, kind: input, shape index: {}]
  %s1 = inlined_call_operand.hbm [shape: bf16[32,256], index: 1, kind: input, shape index: {}]
  %s2 = inlined_call_operand.vmem [shape: f32[1,256], index: 2, kind: input, shape index: {}]
  %s3 = inlined_call_operand.hbm [shape: f32[8,128], index: 3, kind: output, shape index: {0}]
  %s4 = inlined_call_operand.hbm [shape: f32[8,128], index: 4, kind: output, shape index: {1}]
  %s5 = inlined_call_operand.hbm [shape: f32[8,128], index: 5, kind: output, shape index: {2}]
  %6 = xla_tuple %s3, %s4, %s5
  %s7 = sld [smem:[#allocation0]]
  $region46: #{tpu_custom_call.1} parent=0
    _
  %s9 = ssub.s32 1, %s7
  %s10 = scalar_select 0, %s9, %s7
  $region1: #{tpu_custom_call.1} parent=0
    #allocation2 [shape = 'u8[4096]{0}', space=vmem, size = 0x1000, scoped, tag = 'input window, operand 0, single buffered']
    #allocation3 [shape = 's32[1]{0}', space=sflag, size = 0x4, scoped, tag = 'scoped memory for tpu_custom_call.1']
    #allocation4 [shape = 's32[1]{0}', space=sflag, size = 0x4, scoped, tag = 'scoped memory for tpu_custom_call.1']
    #allocation5 [shape = 'u8[16384]{0}', space=vmem, size = 0x4000, scoped, tag = 'input window, operand 1, single buffered']
    #allocation6 [shape = 's32[1]{0}', space=sflag, size = 0x4, scoped, tag = 'scoped memory for tpu_custom_call.1']
    #allocation7 [shape = 'u8[4096]{0}', space=vmem, size = 0x1000, scoped, tag = 'output window, operand 0, single buffered']
    #allocation8 [shape = 'u8[4096]{0}', space=vmem, size = 0x1000, scoped, tag = 'output window, operand 1, single buffered']
    #allocation9 [shape = 's32[1]{0}', space=sflag, size = 0x4, scoped, tag = 'scoped memory for tpu_custom_call.1']
    #allocation10 [shape = 'u8[4096]{0}', space=vmem, size = 0x1000, scoped, tag = 'output window, operand 2, single buffered']
    %11 = vsyncpa [#allocation3], 0
    %12 = vsyncpa [#allocation6], 0
    %13 = vsyncpa [#allocation4], 0
    %14 = vsyncpa [#allocation9], 0
    // Predicated region
    $region2: #{tpu_custom_call.1} parent=1 // pred_check
      _
    $region3: #{tpu_custom_call.1} parent=1 // pred_check_branch
      %16 = sbr.rel (0) target = $region5
    $region4: #{tpu_custom_call.1} parent=1 // pred_region
      %s18 = ssub.s32 128, 128
      %19 = vsyncadd [#allocation3], %s18
      %s21 = sshll.u32 [#allocation2], 4
      %s22 = int_to_ptr.vmem [resolvable:$true] %s21
      %24 = dma.hbm_to_vmem [thread:$0]  %s0, 128, %s22, [#allocation3]
    $region5: #{tpu_custom_call.1} parent=1 // pred_fallthru
      _
    // Predicated region
    $region6: #{tpu_custom_call.1} parent=1 // pred_check
      _
    $region7: #{tpu_custom_call.1} parent=1 // pred_check_branch
      %26 = sbr.rel (0) target = $region9
    $region8: #{tpu_custom_call.1} parent=1 // pred_region
      %s28 = ssub.s32 512, 512
      %29 = vsyncadd [#allocation6], %s28
      %s30 = sshll.u32 [#allocation5], 4
      %s31 = int_to_ptr.vmem [resolvable:$true] %s30
      %36 = dma.hbm_to_vmem [thread:$0]  %s1, 512, %s31, [#allocation6], 128, 128, 8
    $region9: #{tpu_custom_call.1} parent=1 // pred_fallthru
      _
    // Predicated region
    $region10: #{tpu_custom_call.1} parent=1 // pred_check
      _
    $region11: #{tpu_custom_call.1} parent=1 // pred_check_branch
      %38 = sbr.rel (0) target = $region13
    $region12: #{tpu_custom_call.1} parent=1 // pred_region
      _
    $region13: #{tpu_custom_call.1} parent=1 // pred_fallthru
      _
    // Predicated region
    $region14: #{tpu_custom_call.1} parent=1 // pred_check
      _
    $region15: #{tpu_custom_call.1} parent=1 // pred_check_branch
      %40 = sbr.rel (0) target = $region17
    $region16: #{tpu_custom_call.1} parent=1 // pred_region
      %41 = dma.done [#allocation3], 128
    $region17: #{tpu_custom_call.1} parent=1 // pred_fallthru
      _
    // Predicated region
    $region18: #{tpu_custom_call.1} parent=1 // pred_check
      _
    $region19: #{tpu_custom_call.1} parent=1 // pred_check_branch
      %43 = sbr.rel (0) target = $region21
    $region20: #{tpu_custom_call.1} parent=1 // pred_region
      %44 = dma.done [#allocation6], 512
    $region21: #{tpu_custom_call.1} parent=1 // pred_fallthru
      _
    %v46 = vld [vmem:[#allocation2] sm:$0xff]
    %v47 = vpack.c.bf16 %v46, %v46
    %v48 = vld [vmem:[#allocation5] sm:$0xff]
    %v49 = vld [vmem:[#allocation5 + $0x8] sm:$0xff]
    %v50 = vld [vmem:[#allocation5 + $0x10] sm:$0xff]
    %v51 = vld [vmem:[#allocation5 + $0x18] sm:$0xff]
    %v52 = vld [vmem:[%s2] sm:$0x3]
    %v54 = vlaneseq
    %v55 = vshrl.u32 %v54, 7
    %v56 = vsub.s32 0, %v55
    %v57 = vrot.slane %v52, %v56
    %v58 = vlaneseq
    %v59 = vshrl.u32 %v58, 7
    %v60 = vsub.s32 1, %v59
    %v61 = vrot.slane %v52, %v60
    %v68 = vunpack.c.l.b16 %v48
    %v69 = vunpack.c.h.b16 %v48
    %v70 = vunpack.c.l.b16 %v49
    %v71 = vunpack.c.h.b16 %v49
    %v72 = vunpack.c.l.b16 %v50
    %v73 = vunpack.c.h.b16 %v50
    %v74 = vunpack.c.l.b16 %v51
    %v75 = vunpack.c.h.b16 %v51
    %v76 = vpack.c.b16 %v70, %v68
    %v77 = vpack.c.b16 %v71, %v69
    %v78 = vpack.c.b16 %v74, %v72
    %v79 = vpack.c.b16 %v75, %v73
    %vm84 = vcmask 261120
    %v86 = vsel %vm84, %v47, 0
    %88 = vmatprep.subr.bf16.mxu0 0
    %89 = vmatpush1.bf16.msra.mxu0 0
    %90 = vmatprep.subr.bf16.mxu0 0
    %91 = vmatpush1.bf16.msra.mxu0 0
    %92 = vmatprep.subr.bf16.mxu0 0
    %93 = vmatpush1.bf16.msra.mxu0 0
    %94 = vmatprep.subr.bf16.mxu0 0
    %95 = vmatpush1.bf16.msra.mxu0 0
    %96 = vmatprep.subr.bf16.mxu0 0
    %97 = vmatpush1.bf16.msra.mxu0 0
    %98 = vmatprep.subr.bf16.mxu0 0
    %99 = vmatpush1.bf16.msra.mxu0 0
    %100 = vmatprep.subr.bf16.mxu0 %v79
    %101 = vmatpush1.bf16.msra.mxu0 %v78
    %102 = vmatprep.subr.bf16.mxu0 %v77
    %103 = vmatpush1.bf16.msra.mxu0 %v76
    %104 = vmatprep.subr.bf16.mxu0 0
    %105 = vmatpush2.bf16.msra.mxu0 0
    %106 = vmatprep.subr.bf16.mxu0 0
    %107 = vmatpush2.bf16.msra.mxu0 0
    %108 = vmatprep.subr.bf16.mxu0 0
    %109 = vmatpush2.bf16.msra.mxu0 0
    %110 = vmatprep.subr.bf16.mxu0 0
    %111 = vmatpush2.bf16.msra.mxu0 0
    %112 = vmatprep.subr.bf16.mxu0 0
    %113 = vmatpush2.bf16.msra.mxu0 0
    %114 = vmatprep.subr.bf16.mxu0 0
    %115 = vmatpush2.bf16.msra.mxu0 0
    %116 = vmatprep.subr.bf16.mxu0 0
    %117 = vmatpush2.bf16.msra.mxu0 0
    %118 = vmatprep.subr.bf16.mxu0 0
    %119 = vmatpush2.bf16.msra.mxu0 0
    %120 = vmatprep.mubr.bf16.mxu0 0
    %121 = vmatmul.mubr.bf16.gmra.mxu0 %v86
    %v122 = vpop.f32.mrf.mxu0
    %v123 = vadd.f32 %v57, %v122
    %v124 = vpop.f32.mrf.mxu0
    %v125 = vadd.f32 %v61, %v124
    %v126 = vpop.f32.mrf.mxu0
    %v127 = vpop.f32.mrf.mxu0
    %128 = vdwg.mxu0
    %129 = vst [vmem:[#allocation7] sm:$0xff] %v123
    %130 = vst [vmem:[#allocation8] sm:$0xff] %v125
    %v131 = vmul.f32 %v125, 1.442695
    %v132 = vpow.pop %v131
    %133 = vst [vmem:[#allocation10] sm:$0xff] %v132
    // Predicated region
    $region22: #{tpu_custom_call.1} parent=1 // pred_check
      _
    $region23: #{tpu_custom_call.1} parent=1 // pred_check_branch
      %135 = sbr.rel (0) target = $region25
    $region24: #{tpu_custom_call.1} parent=1 // pred_region
      %s137 = ssub.s32 128, 128
      %138 = vsyncadd [#allocation4], %s137
      %s140 = sshll.u32 [#allocation7], 4
      %s141 = int_to_ptr.vmem [resolvable:$true] %s140
      %143 = dma.vmem_to_hbm [thread:$0]  %s141, 128, %s3, [#allocation4]
    $region25: #{tpu_custom_call.1} parent=1 // pred_fallthru
      _
    // Predicated region
    $region26: #{tpu_custom_call.1} parent=1 // pred_check
      _
    $region27: #{tpu_custom_call.1} parent=1 // pred_check_branch
      %145 = sbr.rel (0) target = $region29
    $region28: #{tpu_custom_call.1} parent=1 // pred_region
      %s147 = ssub.s32 128, 128
      %148 = vsyncadd [#allocation9], %s147
      %s150 = sshll.u32 [#allocation8], 4
      %s151 = int_to_ptr.vmem [resolvable:$true] %s150
      %153 = dma.vmem_to_hbm [thread:$0]  %s151, 128, %s4, [#allocation9]
    $region29: #{tpu_custom_call.1} parent=1 // pred_fallthru
      _
    // Predicated region
    $region30: #{tpu_custom_call.1} parent=1 // pred_check
      _
    $region31: #{tpu_custom_call.1} parent=1 // pred_check_branch
      %155 = sbr.rel (0) target = $region33
    $region32: #{tpu_custom_call.1} parent=1 // pred_region
      %s157 = ssub.s32 128, 128
      %158 = vsyncadd [#allocation9], %s157
      %s160 = sshll.u32 [#allocation10], 4
      %s161 = int_to_ptr.vmem [resolvable:$true] %s160
      %163 = dma.vmem_to_hbm [thread:$0]  %s161, 128, %s5, [#allocation9]
    $region33: #{tpu_custom_call.1} parent=1 // pred_fallthru
      _
    // Predicated region
    $region34: #{tpu_custom_call.1} parent=1 // pred_check
      _
    $region35: #{tpu_custom_call.1} parent=1 // pred_check_branch
      %165 = sbr.rel (0) target = $region37
    $region36: #{tpu_custom_call.1} parent=1 // pred_region
      %166 = dma.done [#allocation4], 128
    $region37: #{tpu_custom_call.1} parent=1 // pred_fallthru
      _
    // Predicated region
    $region38: #{tpu_custom_call.1} parent=1 // pred_check
      _
    $region39: #{tpu_custom_call.1} parent=1 // pred_check_branch
      %168 = sbr.rel (0) target = $region41
    $region40: #{tpu_custom_call.1} parent=1 // pred_region
      %169 = dma.done [#allocation9], 128
    $region41: #{tpu_custom_call.1} parent=1 // pred_fallthru
      _
    // Predicated region
    $region42: #{tpu_custom_call.1} parent=1 // pred_check
      _
    $region43: #{tpu_custom_call.1} parent=1 // pred_check_branch
      %171 = sbr.rel (0) target = $region45
    $region44: #{tpu_custom_call.1} parent=1 // pred_region
      %172 = dma.done [#allocation9], 128
    $region45: #{tpu_custom_call.1} parent=1 // pred_fallthru
      _
    %173 = vsyncpa [#allocation3], 1
    %174 = vsyncpa [#allocation6], 1
    %175 = vsyncpa [#allocation4], 1
    %176 = vsyncpa [#allocation9], 1

</llo_original>
